<compile_context>
chip_gen: v5e
topology: v5e:2x2
jax: 0.10.0
libtpu: 0.0.40
codegen_flags: <defaults>
</compile_context>

<pallas_src>
import functools
import math

import jax
import jax.numpy as jnp
from jax.experimental import pallas as pl
from jax.experimental.pallas import tpu as pltpu

_LANE = 128     # TPU lane width (last dim)
_SUBLANE = 8    # TPU sublane width (second-to-last dim)


def _round_up(x, m):
    return ((x + m - 1) // m) * m


# ---------------------------------------------------------------------------
# Fused kernel: all layers in one body, activations held in VMEM/vregs.
# ---------------------------------------------------------------------------
def _fused_mlp_kernel(x_ref, b_ref, *rest, dims, num_classes):
    """rest = (w_0, ..., w_{L-1}, o_ref).

    dims = (input_size, hid0_pad, ..., out_pad): per-layer (padded) widths.
    b_ref is the packed bias table, row i = bias of layer i (zero-padded).
    """
    *w_refs, o_ref = rest
    num_layers = len(w_refs)

    x = x_ref[...]                                           # (Bt, input_size)
    y = None
    for i in range(num_layers):
        d_out = dims[i + 1]
        y = jnp.dot(x.astype(jnp.bfloat16), w_refs[i][...],
                    preferred_element_type=jnp.float32)      # bf16 MXU, f32 acc
        y = y + b_ref[i:i + 1, :d_out]                       # f32 bias add
        if i < num_layers - 1:
            x = jnp.maximum(y, 0.0)                          # f32 ReLU (v5e-safe)
            # TODO(synk): training-mode dropout (pltpu.prng_random_bits mask)
            # not emitted; nn.Dropout is identity in eval mode.

    # log_softmax over the real class columns only; padded columns masked out.
    col = jax.lax.broadcasted_iota(jnp.int32, y.shape, 1)
    y = jnp.where(col < num_classes, y, -1e30)
    m = jnp.max(y, axis=1, keepdims=True)
    z = y - m
    lse = jnp.log(jnp.sum(jnp.exp(z), axis=1, keepdims=True))    # EUP exp/log
    o_ref[...] = z - lse                                     # lane-dense store


# ---------------------------------------------------------------------------
# Module wrapper
# ---------------------------------------------------------------------------
class CustomClassifierPallas:
    """JAX/Pallas port of CustomClassifier (inference / eval mode)."""

    def __init__(self, input_size, output_size, hidden_layers, drop_p, key):
        assert isinstance(input_size, int), 'Enter input size as an integer'
        assert isinstance(output_size, int), 'Enter output size as an integer'
        assert isinstance(hidden_layers, list) and len(hidden_layers) > 0
        assert all(isinstance(h, int) for h in hidden_layers)
        assert isinstance(drop_p, list) and len(drop_p) == len(hidden_layers)
        assert all(isinstance(p, float) and 0.0 <= p <= 1.0 for p in drop_p)

        self.input_size = input_size
        self.num_classes = output_size
        self.drop_p = drop_p  # nn.Dropout is identity at inference

        real_dims = [input_size] + hidden_layers + [output_size]
        # Lane-pad every layer *output* to a multiple of 128; the input feature
        # dim stays at its real width (no host-side input-padding pass needed).
        self.pad_dims = [input_size] + [_round_up(d, _LANE) for d in real_dims[1:]]

        num_layers = len(real_dims) - 1
        max_out_pad = max(self.pad_dims[1:])

        # PyTorch nn.Linear default init: U(-1/sqrt(fan_in), +1/sqrt(fan_in)).
        # Weights stored transposed as (in, out), zero-padded, bf16; biases are
        # packed into a single (num_layers, max_out_pad) f32 table.
        keys = jax.random.split(key, num_layers)
        weights = []
        biases = jnp.zeros((num_layers, max_out_pad), jnp.float32)
        for i in range(num_layers):
            fan_in, fan_out = real_dims[i], real_dims[i + 1]
            in_pad, out_pad = self.pad_dims[i], self.pad_dims[i + 1]
            kw, kb = jax.random.split(keys[i])
            bound = 1.0 / math.sqrt(fan_in)
            w = jax.random.uniform(kw, (fan_in, fan_out), jnp.float32, -bound, bound)
            b = jax.random.uniform(kb, (fan_out,), jnp.float32, -bound, bound)
            w_pad = jnp.zeros((in_pad, out_pad), jnp.float32).at[:fan_in, :fan_out].set(w)
            weights.append(w_pad.astype(jnp.bfloat16))
            biases = biases.at[i, :fan_out].set(b)
        self.weights = weights
        self.biases = biases

    def __call__(self, x, *, b_tile=None):
        assert x.ndim == 2 and x.shape[1] == self.input_size
        B = x.shape[0]

        # Tiny-batch corner case: pad rows up to one sublane so the block never
        # exceeds the array rows (negligible cost; main path stays pad-free).
        if B < _SUBLANE:
            x = jnp.pad(x, ((0, _SUBLANE - B), (0, 0)))
        Bp = x.shape[0]

        # Batch tile: big enough to amortize grid-step overhead (cap 512),
        # >= 2 tiles when B > 8 so both v7x TensorCores get work, a multiple of
        # 8 sublanes, and never larger than the (row-padded) batch.
        if b_tile is None:
            b_tile = _round_up(-(-Bp // 2), _SUBLANE) if Bp > _SUBLANE else _SUBLANE
            b_tile = min(b_tile, 512)
        b_tile = max(_SUBLANE, (min(int(b_tile), Bp) // _SUBLANE) * _SUBLANE)

        n_tiles = -(-Bp // b_tile)   # trailing partial block rows are discarded below
        out_pad = self.pad_dims[-1]

        # Replicated (grid-invariant) parameters.  When their resident footprint
        # is large (wide layers), single-buffer them: the index_map is constant
        # so extra buffers buy nothing and would double VMEM (v7x: 64 MiB total).
        w_bytes = sum(int(w.size) * w.dtype.itemsize for w in self.weights)
        b_bytes = int(self.biases.size) * 4
        single_buffer = (2 * w_bytes) > (8 << 20)

        def rep_spec(shape):
            if single_buffer:
                return pl.BlockSpec(shape, lambda i: (0,) * len(shape),
                                    pipeline_mode=pl.Buffered(1))
            return pl.BlockSpec(shape, lambda i: (0,) * len(shape))

        in_specs = [pl.BlockSpec((b_tile, self.input_size), lambda i: (i, 0)),
                    rep_spec(self.biases.shape)]
        in_specs += [rep_spec(w.shape) for w in self.weights]
        out_spec = pl.BlockSpec((b_tile, out_pad), lambda i: (i, 0))

        # VMEM budget: double-buffered I/O tiles + resident params + live acts.
        in_tile_b = b_tile * self.input_size * x.dtype.itemsize
        out_tile_b = b_tile * out_pad * 4
        act_b = 2 * b_tile * max(self.pad_dims) * 4
        wbuf = 1 if single_buffer else 2
        est = 2 * (in_tile_b + out_tile_b) + wbuf * w_bytes + 2 * b_bytes + act_b
        vmem_limit = int(min(64 << 20, max(32 << 20, 2 * est)))

        flops = 2 * Bp * sum(self.pad_dims[i] * self.pad_dims[i + 1]
                             for i in range(len(self.pad_dims) - 1))
        bytes_accessed = (Bp * self.input_size * x.dtype.itemsize
                          + Bp * out_pad * 4 + w_bytes + b_bytes)
        cost = pl.CostEstimate(flops=flops,
                               transcendentals=Bp * (out_pad + 1),
                               bytes_accessed=bytes_accessed)

        kernel = functools.partial(_fused_mlp_kernel,
                                   dims=tuple(self.pad_dims),
                                   num_classes=self.num_classes)

        out_padded = pl.pallas_call(
            kernel,
            out_shape=jax.ShapeDtypeStruct((Bp, out_pad), jnp.float32),
            grid=(n_tiles,),
            in_specs=in_specs,
            out_specs=out_spec,
            compiler_params=pltpu.CompilerParams(
                dimension_semantics=("parallel",),   # batch tiles across TCs (v7x)
                vmem_limit_bytes=vmem_limit,
            ),
            cost_estimate=cost,
        )(x, self.biases, *self.weights)

        return out_padded[:B, :self.num_classes]


# ---------------------------------------------------------------------------
# Pure-JAX reference (same bf16-matmul / f32-accum math) for sanity checking
# ---------------------------------------------------------------------------
def _reference(model, x):
    h = x.astype(jnp.float32)
    n = len(model.weights)
    for i, w in enumerate(model.weights):
        h = (jnp.dot(h.astype(jnp.bfloat16), w, preferred_element_type=jnp.float32)
             + model.biases[i, :w.shape[1]])
        if i < n - 1:
            h = jnp.maximum(h, 0.0)
    logits = h[:, :model.num_classes]
    return jax.nn.log_softmax(logits, axis=1)


if __name__ == "__main__":
    key = jax.random.PRNGKey(0)
    k_model, k_x = jax.random.split(key)

    input_size = 32
    output_size = 10
    hidden_layers = [64, 32]
    drop_p = [0.2, 0.3]
    batch = 20   # not a multiple of the 16-row tile -> exercises 2 grid tiles
                 # (parallel axis) plus the partial trailing block path.

    model = CustomClassifierPallas(input_size, output_size, hidden_layers,
                                   drop_p, k_model)
    x = jax.random.normal(k_x, (batch, input_size), dtype=jnp.float32)

    out = jax.block_until_ready(model(x))
    ref = _reference(model, x)

    assert out.shape == (batch, output_size)
    assert bool(jnp.all(jnp.isfinite(out)))
    assert jnp.allclose(out, ref, atol=2e-4, rtol=2e-4), "mismatch vs reference"
    # log_softmax rows should sum (in prob space) to ~1
    assert jnp.allclose(jnp.sum(jnp.exp(out), axis=1), 1.0, atol=1e-4)

    print("KERNEL_OK")
</pallas_src>

<mosaic_0001>
module attributes {stable_mosaic.version = 11 : i64} {
  func.func @_fused_mlp_kernel(%arg0: i32, %arg1: memref<16x32xf32, #tpu.memory_space<vmem>>, %arg2: memref<3x128xf32, #tpu.memory_space<vmem>>, %arg3: memref<32x128xbf16, #tpu.memory_space<vmem>>, %arg4: memref<128x128xbf16, #tpu.memory_space<vmem>>, %arg5: memref<128x128xbf16, #tpu.memory_space<vmem>>, %arg6: memref<16x128xf32, #tpu.memory_space<vmem>>) attributes {dimension_semantics = [#tpu.dimension_semantics<parallel>], iteration_bounds = array<i64: 2>, scalar_prefetch = 0 : i64, scratch_operands = 0 : i64, tpu.core_type = #tpu.core_type<tc>, window_params = [{transform_indices = @transform_0, window_bounds = array<i64: 16, 32>}, {pipeline_mode = #tpu.pipeline_mode<synchronous>, transform_indices = @transform_1, window_bounds = array<i64: 3, 128>}, {pipeline_mode = #tpu.pipeline_mode<synchronous>, transform_indices = @transform_2, window_bounds = array<i64: 32, 128>}, {pipeline_mode = #tpu.pipeline_mode<synchronous>, transform_indices = @transform_3, window_bounds = array<i64: 128, 128>}, {pipeline_mode = #tpu.pipeline_mode<synchronous>, transform_indices = @transform_4, window_bounds = array<i64: 128, 128>}, {transform_indices = @transform_5, window_bounds = array<i64: 16, 128>}]} {
    %c0 = arith.constant 0 : index
    %c0_0 = arith.constant 0 : index
    %0 = vector.load %arg1[%c0, %c0_0] : memref<16x32xf32, #tpu.memory_space<vmem>>, vector<16x32xf32>
    %1 = arith.truncf %0 : vector<16x32xf32> to vector<16x32xbf16>
    %c0_1 = arith.constant 0 : index
    %c0_2 = arith.constant 0 : index
    %2 = vector.load %arg3[%c0_1, %c0_2] : memref<32x128xbf16, #tpu.memory_space<vmem>>, vector<32x128xbf16>
    %cst = arith.constant dense<0.000000e+00> : vector<16x128xf32>
    %3 = tpu.matmul %1, %2, %cst {dimension_numbers = #tpu.dot_dimension_numbers<[1], [0], [0], [1], [0, 0, 1, 1], [], []>} : vector<16x32xbf16>, vector<32x128xbf16>, vector<16x128xf32> -> vector<16x128xf32>
    %c0_3 = arith.constant 0 : index
    %c0_4 = arith.constant 0 : index
    %4 = vector.load %arg2[%c0_3, %c0_4] : memref<3x128xf32, #tpu.memory_space<vmem>>, vector<1x128xf32>
    %5 = vector.broadcast %4 : vector<1x128xf32> to vector<16x128xf32>
    %6 = arith.addf %3, %5 : vector<16x128xf32>
    %cst_5 = arith.constant 0.000000e+00 : f32
    %7 = vector.broadcast %cst_5 : f32 to vector<16x128xf32>
    %8 = arith.maximumf %6, %7 : vector<16x128xf32>
    %9 = arith.truncf %8 : vector<16x128xf32> to vector<16x128xbf16>
    %c0_6 = arith.constant 0 : index
    %c0_7 = arith.constant 0 : index
    %10 = vector.load %arg4[%c0_6, %c0_7] : memref<128x128xbf16, #tpu.memory_space<vmem>>, vector<128x128xbf16>
    %cst_8 = arith.constant dense<0.000000e+00> : vector<16x128xf32>
    %11 = tpu.matmul %9, %10, %cst_8 {dimension_numbers = #tpu.dot_dimension_numbers<[1], [0], [0], [1], [0, 0, 1, 1], [], []>} : vector<16x128xbf16>, vector<128x128xbf16>, vector<16x128xf32> -> vector<16x128xf32>
    %c1 = arith.constant 1 : index
    %c0_9 = arith.constant 0 : index
    %12 = vector.load %arg2[%c1, %c0_9] : memref<3x128xf32, #tpu.memory_space<vmem>>, vector<1x128xf32>
    %13 = vector.broadcast %12 : vector<1x128xf32> to vector<16x128xf32>
    %14 = arith.addf %11, %13 : vector<16x128xf32>
    %cst_10 = arith.constant 0.000000e+00 : f32
    %15 = vector.broadcast %cst_10 : f32 to vector<16x128xf32>
    %16 = arith.maximumf %14, %15 : vector<16x128xf32>
    %17 = arith.truncf %16 : vector<16x128xf32> to vector<16x128xbf16>
    %c0_11 = arith.constant 0 : index
    %c0_12 = arith.constant 0 : index
    %18 = vector.load %arg5[%c0_11, %c0_12] : memref<128x128xbf16, #tpu.memory_space<vmem>>, vector<128x128xbf16>
    %cst_13 = arith.constant dense<0.000000e+00> : vector<16x128xf32>
    %19 = tpu.matmul %17, %18, %cst_13 {dimension_numbers = #tpu.dot_dimension_numbers<[1], [0], [0], [1], [0, 0, 1, 1], [], []>} : vector<16x128xbf16>, vector<128x128xbf16>, vector<16x128xf32> -> vector<16x128xf32>
    %c2 = arith.constant 2 : index
    %c0_14 = arith.constant 0 : index
    %20 = vector.load %arg2[%c2, %c0_14] : memref<3x128xf32, #tpu.memory_space<vmem>>, vector<1x128xf32>
    %21 = vector.broadcast %20 : vector<1x128xf32> to vector<16x128xf32>
    %22 = arith.addf %19, %21 : vector<16x128xf32>
    %23 = tpu.iota {dimensions = array<i32: 1>} : vector<16x128xi32>
    %c10_i32 = arith.constant 10 : i32
    %24 = vector.broadcast %c10_i32 : i32 to vector<16x128xi32>
    %25 = arith.cmpi slt, %23, %24 : vector<16x128xi32>
    %cst_15 = arith.constant -1.000000e+30 : f32
    %26 = vector.broadcast %cst_15 : f32 to vector<16x128xf32>
    %27 = arith.select %25, %22, %26 : vector<16x128xi1>, vector<16x128xf32>
    %cst_16 = arith.constant dense<0xFF800000> : vector<16xf32>
    %28 = vector.multi_reduction <maximumf>, %27, %cst_16 [1] : vector<16x128xf32> to vector<16xf32>
    %29 = vector.shape_cast %28 : vector<16xf32> to vector<16x1xf32>
    %30 = vector.broadcast %29 : vector<16x1xf32> to vector<16x128xf32>
    %31 = arith.subf %27, %30 : vector<16x128xf32>
    %32 = math.exp %31 : vector<16x128xf32>
    %cst_17 = arith.constant dense<0.000000e+00> : vector<16xf32>
    %33 = vector.multi_reduction <add>, %32, %cst_17 [1] : vector<16x128xf32> to vector<16xf32>
    %34 = vector.shape_cast %33 : vector<16xf32> to vector<16x1xf32>
    %35 = math.log %34 : vector<16x1xf32>
    %36 = vector.broadcast %35 : vector<16x1xf32> to vector<16x128xf32>
    %37 = arith.subf %31, %36 : vector<16x128xf32>
    %c0_18 = arith.constant 0 : index
    %c0_19 = arith.constant 0 : index
    %38 = vector.load %arg6[%c0_18, %c0_19] : memref<16x128xf32, #tpu.memory_space<vmem>>, vector<16x128xf32>
    tpu.vector_store %arg6[%c0_18, %c0_19], %37 {strides = array<i32>} : memref<16x128xf32, #tpu.memory_space<vmem>>, vector<16x128xf32>,
    return
  }
  func.func @transform_0(%arg0: i32) -> (i32, i32) {
    %c0_i32 = arith.constant 0 : i32
    %c0_i32_0 = arith.constant 0 : i32
    return %arg0, %c0_i32 : i32, i32
  }
  func.func @transform_1(%arg0: i32) -> (i32, i32) {
    %c0_i32 = arith.constant 0 : i32
    %c0_i32_0 = arith.constant 0 : i32
    %c0_i32_1 = arith.constant 0 : i32
    return %c0_i32, %c0_i32_0 : i32, i32
  }
  func.func @transform_2(%arg0: i32) -> (i32, i32) {
    %c0_i32 = arith.constant 0 : i32
    %c0_i32_0 = arith.constant 0 : i32
    %c0_i32_1 = arith.constant 0 : i32
    return %c0_i32, %c0_i32_0 : i32, i32
  }
  func.func @transform_3(%arg0: i32) -> (i32, i32) {
    %c0_i32 = arith.constant 0 : i32
    %c0_i32_0 = arith.constant 0 : i32
    %c0_i32_1 = arith.constant 0 : i32
    return %c0_i32, %c0_i32_0 : i32, i32
  }
  func.func @transform_4(%arg0: i32) -> (i32, i32) {
    %c0_i32 = arith.constant 0 : i32
    %c0_i32_0 = arith.constant 0 : i32
    %c0_i32_1 = arith.constant 0 : i32
    return %c0_i32, %c0_i32_0 : i32, i32
  }
  func.func @transform_5(%arg0: i32) -> (i32, i32) {
    %c0_i32 = arith.constant 0 : i32
    %c0_i32_0 = arith.constant 0 : i32
    return %arg0, %c0_i32 : i32, i32
  }
}

</mosaic_0001>

<llo_original>
// kernel: tpu_custom_call.1
$region0: #{tpu_custom_call.1}
  #allocation0 [shape = 'u32[]', space=smem, size = 0x4, offset = 0x4, fixed_abs, tag = 'smem constant byte address 0x4 - core index']
  #allocation1 [shape = 'u32[72,128]{1,0:T(1,128)}', space=vmem, size = 0x9000, scoped, tag = 'internal scratch']
  %s0 = inlined_call_operand.hbm [shape: f32[20,32], index: 0, kind: input, shape index: {}]
  %s1 = inlined_call_operand.hbm [shape: f32[3,128], index: 1, kind: input, shape index: {}]
  %s2 = inlined_call_operand.hbm [shape: bf16[32,128], index: 2, kind: input, shape index: {}]
  %s3 = inlined_call_operand.hbm [shape: bf16[128,128], index: 3, kind: input, shape index: {}]
  %s4 = inlined_call_operand.hbm [shape: bf16[128,128], index: 4, kind: input, shape index: {}]
  %s5 = inlined_call_operand.hbm [shape: f32[20,128], index: 5, kind: output, shape index: {}]
  %s6 = sld [smem:[#allocation0]]
  $region73: #{tpu_custom_call.1} parent=0
    _
  %s8 = ssub.s32 1, %s6
  %s9 = scalar_select 0, %s8, %s6
  $region1: #{tpu_custom_call.1} parent=0
    #allocation2 [shape = 'u8[16384]{0}', space=vmem, size = 0x4000, scoped, tag = 'input window, operand 0']
    #allocation3 [shape = 's32[2]{0}', space=sflag, size = 0x8, scoped, tag = 'scoped memory for tpu_custom_call.1']
    #allocation4 [shape = 's32[2]{0}', space=sflag, size = 0x8, scoped, tag = 'scoped memory for tpu_custom_call.1']
    #allocation5 [shape = 'u8[2048]{0}', space=vmem, size = 0x800, scoped, tag = 'input window, operand 1, single buffered']
    #allocation6 [shape = 's32[1]{0}', space=sflag, size = 0x4, scoped, tag = 'scoped memory for tpu_custom_call.1']
    #allocation7 [shape = 'u8[8192]{0}', space=vmem, size = 0x2000, scoped, tag = 'input window, operand 2, single buffered']
    #allocation8 [shape = 'u8[32768]{0}', space=vmem, size = 0x8000, scoped, tag = 'input window, operand 3, single buffered']
    #allocation9 [shape = 's32[1]{0}', space=sflag, size = 0x4, scoped, tag = 'scoped memory for tpu_custom_call.1']
    #allocation10 [shape = 'u8[32768]{0}', space=vmem, size = 0x8000, scoped, tag = 'input window, operand 4, single buffered']
    #allocation11 [shape = 'u8[16384]{0}', space=vmem, size = 0x4000, scoped, tag = 'output window, operand 0']
    %10 = vsyncpa [#allocation3], 0
    %s11 = scalar_lea.sflag [#allocation3], 1
    %12 = vsyncpa %s11, 0
    %13 = vsyncpa [#allocation6], 0
    %14 = vsyncpa [#allocation9], 0
    %15 = vsyncpa [#allocation4], 0
    %s16 = scalar_lea.sflag [#allocation4], 1
    %17 = vsyncpa %s16, 0
    loop: start=0, step=1, limit=4
    $region2: #{tpu_custom_call.1} parent=1 // loop_pre_header
      _
    $region3: #{tpu_custom_call.1} parent=1 // loop_header
      %s19 = sphi 0, %s23
      %p20 = scmp.ge.s32.totalorder %s19, 4
      %s29 = sphi 0, %s31
      %s32 = sphi 0, %s29
      %s33 = sphi 0, %s32
      %s49 = sphi 0, %s33
      %s53 = sphi 0, %s53
      %s55 = sphi 0, %s53
      %s56 = sphi 0, %s55
      %s70 = sphi 0, %s56
      %s74 = sphi 0, %s74
      %s76 = sphi 0, %s74
      %s77 = sphi 0, %s76
      %s91 = sphi 0, %s77
      %s95 = sphi 0, %s95
      %s97 = sphi 0, %s95
      %s98 = sphi 0, %s97
      %s112 = sphi 0, %s98
      %s116 = sphi 0, %s116
      %s118 = sphi 0, %s116
      %s119 = sphi 0, %s118
      %s133 = sphi 0, %s119
      %s139 = sphi 0, %s141
      %s142 = sphi 0, %s139
      %s143 = sphi 0, %s142
      %s159 = sphi 0, %s143
    $region4: #{tpu_custom_call.1} parent=1 // loop_header_branch
      %22 = sbr.rel (%p20) target = $region8
    $region5: #{tpu_custom_call.1} parent=1 // loop_body
      %s24 = ssub.s32 %s19, 1
      %s25 = ssub.s32 %s19, 2
      %s26 = sadd.s32 %s19, 1
      %s27 = ssub.s32 %s19, %s26
      %p28 = scmp.eq.s32.totalorder %s27, 0
      %s30 = sadd.s32 %s29, 1
      %s31 = scalar_select %p28, %s29, %s30
      %p34 = pneg %p28
      %p35 = scmp.eq.s32.totalorder %s19, 1
      %p36 = por %p34, %p35
      %p37 = scmp.ne.s32.totalorder %s29, %s32
      %p38 = scmp.eq.s32.totalorder %s19, 0
      %p39 = por %p37, %p38
      %p40 = scmp.ne.s32.totalorder %s29, %s32
      %p41 = scmp.eq.s32.totalorder %s24, 1
      %p42 = por %p40, %p41
      %p43 = scmp.ne.s32.totalorder %s32, %s33
      %p44 = scmp.eq.s32.totalorder %s24, 0
      %p45 = por %p43, %p44
      %p46 = scmp.ne.s32.totalorder %s32, %s33
      %p47 = scmp.eq.s32.totalorder %s25, 1
      %p48 = por %p46, %p47
      %p50 = scmp.ne.s32.totalorder %s33, %s49
      %p51 = scmp.eq.s32.totalorder %s25, 0
      %p52 = por %p50, %p51
      %s54 = sadd.s32 %s53, 1
      %p57 = scmp.eq.s32.totalorder %s19, 1
      %p58 = scmp.ne.s32.totalorder %s53, %s55
      %p59 = scmp.eq.s32.totalorder %s19, 0
      %p60 = por %p58, %p59
      %p61 = scmp.ne.s32.totalorder %s53, %s55
      %p62 = scmp.eq.s32.totalorder %s24, 1
      %p63 = por %p61, %p62
      %p64 = scmp.ne.s32.totalorder %s55, %s56
      %p65 = scmp.eq.s32.totalorder %s24, 0
      %p66 = por %p64, %p65
      %p67 = scmp.ne.s32.totalorder %s55, %s56
      %p68 = scmp.eq.s32.totalorder %s25, 1
      %p69 = por %p67, %p68
      %p71 = scmp.ne.s32.totalorder %s56, %s70
      %p72 = scmp.eq.s32.totalorder %s25, 0
      %p73 = por %p71, %p72
      %s75 = sadd.s32 %s74, 1
      %p78 = scmp.eq.s32.totalorder %s19, 1
      %p79 = scmp.ne.s32.totalorder %s74, %s76
      %p80 = scmp.eq.s32.totalorder %s19, 0
      %p81 = por %p79, %p80
      %p82 = scmp.ne.s32.totalorder %s74, %s76
      %p83 = scmp.eq.s32.totalorder %s24, 1
      %p84 = por %p82, %p83
      %p85 = scmp.ne.s32.totalorder %s76, %s77
      %p86 = scmp.eq.s32.totalorder %s24, 0
      %p87 = por %p85, %p86
      %p88 = scmp.ne.s32.totalorder %s76, %s77
      %p89 = scmp.eq.s32.totalorder %s25, 1
      %p90 = por %p88, %p89
      %p92 = scmp.ne.s32.totalorder %s77, %s91
      %p93 = scmp.eq.s32.totalorder %s25, 0
      %p94 = por %p92, %p93
      %s96 = sadd.s32 %s95, 1
      %p99 = scmp.eq.s32.totalorder %s19, 1
      %p100 = scmp.ne.s32.totalorder %s95, %s97
      %p101 = scmp.eq.s32.totalorder %s19, 0
      %p102 = por %p100, %p101
      %p103 = scmp.ne.s32.totalorder %s95, %s97
      %p104 = scmp.eq.s32.totalorder %s24, 1
      %p105 = por %p103, %p104
      %p106 = scmp.ne.s32.totalorder %s97, %s98
      %p107 = scmp.eq.s32.totalorder %s24, 0
      %p108 = por %p106, %p107
      %p109 = scmp.ne.s32.totalorder %s97, %s98
      %p110 = scmp.eq.s32.totalorder %s25, 1
      %p111 = por %p109, %p110
      %p113 = scmp.ne.s32.totalorder %s98, %s112
      %p114 = scmp.eq.s32.totalorder %s25, 0
      %p115 = por %p113, %p114
      %s117 = sadd.s32 %s116, 1
      %p120 = scmp.eq.s32.totalorder %s19, 1
      %p121 = scmp.ne.s32.totalorder %s116, %s118
      %p122 = scmp.eq.s32.totalorder %s19, 0
      %p123 = por %p121, %p122
      %p124 = scmp.ne.s32.totalorder %s116, %s118
      %p125 = scmp.eq.s32.totalorder %s24, 1
      %p126 = por %p124, %p125
      %p127 = scmp.ne.s32.totalorder %s118, %s119
      %p128 = scmp.eq.s32.totalorder %s24, 0
      %p129 = por %p127, %p128
      %p130 = scmp.ne.s32.totalorder %s118, %s119
      %p131 = scmp.eq.s32.totalorder %s25, 1
      %p132 = por %p130, %p131
      %p134 = scmp.ne.s32.totalorder %s119, %s133
      %p135 = scmp.eq.s32.totalorder %s25, 0
      %p136 = por %p134, %p135
      %s137 = ssub.s32 %s19, %s26
      %p138 = scmp.eq.s32.totalorder %s137, 0
      %s140 = sadd.s32 %s139, 1
      %s141 = scalar_select %p138, %s139, %s140
      %p144 = pneg %p138
      %p145 = scmp.eq.s32.totalorder %s19, 1
      %p146 = por %p144, %p145
      %p147 = scmp.ne.s32.totalorder %s139, %s142
      %p148 = scmp.eq.s32.totalorder %s19, 0
      %p149 = por %p147, %p148
      %p150 = scmp.ne.s32.totalorder %s139, %s142
      %p151 = scmp.eq.s32.totalorder %s24, 1
      %p152 = por %p150, %p151
      %p153 = scmp.ne.s32.totalorder %s142, %s143
      %p154 = scmp.eq.s32.totalorder %s24, 0
      %p155 = por %p153, %p154
      %p156 = scmp.ne.s32.totalorder %s142, %s143
      %p157 = scmp.eq.s32.totalorder %s25, 1
      %p158 = por %p156, %p157
      %p160 = scmp.ne.s32.totalorder %s143, %s159
      %p161 = scmp.eq.s32.totalorder %s25, 0
      %p162 = por %p160, %p161
      %p163 = scmp.le.s32.totalorder 1, %s19
      %p164 = scmp.lt.s32.totalorder %s19, 3
      %p165 = pnand %p163, %p164
      %p166 = pneg %p165
      // Predicated region
      $region9: #{tpu_custom_call.1} parent=5 // pred_check
        _
      $region10: #{tpu_custom_call.1} parent=5 // pred_check_branch
        %168 = sbr.rel (%p165) target = $region12
      $region11: #{tpu_custom_call.1} parent=5 // pred_region
        %s169 = ssub.s32 %s19, 1
        // Predicated region
        $region13: #{tpu_custom_call.1} parent=11 // pred_check
          %p170 = pneg %p66
        $region14: #{tpu_custom_call.1} parent=11 // pred_check_branch
          %172 = sbr.rel (%p170) target = $region16
        $region15: #{tpu_custom_call.1} parent=11 // pred_region
          %174 = vsyncadd [#allocation6], 0
          %s176 = sshll.u32 %s1, 4
          %s177 = int_to_ptr.hbm [resolvable:$true] %s176
          %s178 = sshll.u32 [#allocation5], 4
          %s179 = int_to_ptr.vmem [resolvable:$true] %s178
          %181 = dma.hbm_to_vmem [thread:$0]  %s177, 64, %s179, [#allocation6]
        $region16: #{tpu_custom_call.1} parent=11 // pred_fallthru
          _
        // Predicated region
        $region17: #{tpu_custom_call.1} parent=11 // pred_check
          %p182 = pneg %p87
        $region18: #{tpu_custom_call.1} parent=11 // pred_check_branch
          %184 = sbr.rel (%p182) target = $region20
        $region19: #{tpu_custom_call.1} parent=11 // pred_region
          %186 = vsyncadd [#allocation6], 0
          %s187 = sshll.u32 %s2, 4
          %s188 = int_to_ptr.hbm [resolvable:$true] %s187
          %s189 = sshll.u32 [#allocation7], 4
          %s190 = int_to_ptr.vmem [resolvable:$true] %s189
          %195 = dma.hbm_to_vmem [thread:$0]  %s188, 256, %s190, [#allocation6], 64, 64, 4
        $region20: #{tpu_custom_call.1} parent=11 // pred_fallthru
          _
        // Predicated region
        $region21: #{tpu_custom_call.1} parent=11 // pred_check
          %p196 = pneg %p108
        $region22: #{tpu_custom_call.1} parent=11 // pred_check_branch
          %198 = sbr.rel (%p196) target = $region24
        $region23: #{tpu_custom_call.1} parent=11 // pred_region
          %200 = vsyncadd [#allocation9], 0
          %s201 = sshll.u32 %s3, 4
          %s202 = int_to_ptr.hbm [resolvable:$true] %s201
          %s203 = sshll.u32 [#allocation8], 4
          %s204 = int_to_ptr.vmem [resolvable:$true] %s203
          %209 = dma.hbm_to_vmem [thread:$0]  %s202, 1024, %s204, [#allocation9], 64, 64, 4
        $region24: #{tpu_custom_call.1} parent=11 // pred_fallthru
          _
        // Predicated region
        $region25: #{tpu_custom_call.1} parent=11 // pred_check
          %p210 = pneg %p129
        $region26: #{tpu_custom_call.1} parent=11 // pred_check_branch
          %212 = sbr.rel (%p210) target = $region28
        $region27: #{tpu_custom_call.1} parent=11 // pred_region
          %214 = vsyncadd [#allocation9], 0
          %s215 = sshll.u32 %s4, 4
          %s216 = int_to_ptr.hbm [resolvable:$true] %s215
          %s217 = sshll.u32 [#allocation10], 4
          %s218 = int_to_ptr.vmem [resolvable:$true] %s217
          %223 = dma.hbm_to_vmem [thread:$0]  %s216, 1024, %s218, [#allocation9], 64, 64, 4
        $region28: #{tpu_custom_call.1} parent=11 // pred_fallthru
          _
      $region12: #{tpu_custom_call.1} parent=5 // pred_fallthru
        _
      %p224 = scmp.lt.s32.totalorder %s19, 2
      // Predicated region
      $region29: #{tpu_custom_call.1} parent=5 // pred_check
        %p225 = pneg %p224
      $region30: #{tpu_custom_call.1} parent=5 // pred_check_branch
        %227 = sbr.rel (%p225) target = $region32
      $region31: #{tpu_custom_call.1} parent=5 // pred_region
        // Predicated region
        $region33: #{tpu_custom_call.1} parent=31 // pred_check
          %p228 = pneg %p39
        $region34: #{tpu_custom_call.1} parent=31 // pred_check_branch
          %230 = sbr.rel (%p228) target = $region36
        $region35: #{tpu_custom_call.1} parent=31 // pred_region
          %s231 = sand.u32 %s29, 1
          %s232 = scalar_lea.sflag [#allocation3], %s231
          %s233 = sand.u32 %s29, 1
          %s234 = smul.addr %s233, 16
          %s235 = scalar_lea.vmem [#allocation2], %s234
          %s236 = smul.u32 2, %s19
          %s237 = ssub.s32 3, %s236
          %p238 = scmp.lt.s32.totalorder %s237, 2
          %s239 = scalar_select %p238, %s237, 2
          %s240 = smul.u32 8, %s239
          %s241 = ssub.s32 16, %s240
          %s242 = sshll.u32 %s241, 4
          %243 = vsyncadd %s232, %s242
          %p244 = scmp.ne.s32.totalorder 0, %s240
          %s245 = smul.addr %s236, 8
          %s246 = scalar_lea.hbm %s0, %s245
          %s247 = smul.u32 8, %s239
          %s248 = sshll.u32 %s246, 4
          %s249 = int_to_ptr.hbm [resolvable:$true] %s248
          %s250 = sshll.u32 %s235, 4
          %s251 = int_to_ptr.vmem [resolvable:$true] %s250
          %s252 = sshll.u32 %s247, 4
          %256 = dma.hbm_to_vmem [thread:$0]  (%p244), %s249, %s252, %s251, %s232, 128, 128, 8
        $region36: #{tpu_custom_call.1} parent=31 // pred_fallthru
          _
      $region32: #{tpu_custom_call.1} parent=5 // pred_fallthru
        _
      %p257 = scmp.le.s32.totalorder 1, %s19
      %p258 = scmp.lt.s32.totalorder %s19, 3
      %p259 = pnand %p257, %p258
      %p260 = pneg %p259
      // Predicated region
      $region37: #{tpu_custom_call.1} parent=5 // pred_check
        _
      $region38: #{tpu_custom_call.1} parent=5 // pred_check_branch
        %262 = sbr.rel (%p259) target = $region40
      $region39: #{tpu_custom_call.1} parent=5 // pred_region
        %s263 = ssub.s32 %s19, 1
        %s264 = sand.u32 %s32, 1
        %s265 = scalar_lea.sflag [#allocation3], %s264
        %s266 = sand.u32 %s32, 1
        %s267 = smul.addr %s266, 16
        %s268 = scalar_lea.vmem [#allocation2], %s267
        // Predicated region
        $region41: #{tpu_custom_call.1} parent=39 // pred_check
          %p269 = pneg %p45
        $region42: #{tpu_custom_call.1} parent=39 // pred_check_branch
          %271 = sbr.rel (%p269) target = $region44
        $region43: #{tpu_custom_call.1} parent=39 // pred_region
          %273 = dma.done %s265, 256
        $region44: #{tpu_custom_call.1} parent=39 // pred_fallthru
          _
        // Predicated region
        $region45: #{tpu_custom_call.1} parent=39 // pred_check
          %p274 = pneg %p66
        $region46: #{tpu_custom_call.1} parent=39 // pred_check_branch
          %276 = sbr.rel (%p274) target = $region48
        $region47: #{tpu_custom_call.1} parent=39 // pred_region
          %278 = dma.done [#allocation6], 64
        $region48: #{tpu_custom_call.1} parent=39 // pred_fallthru
          _
        // Predicated region
        $region49: #{tpu_custom_call.1} parent=39 // pred_check
          %p279 = pneg %p87
        $region50: #{tpu_custom_call.1} parent=39 // pred_check_branch
          %281 = sbr.rel (%p279) target = $region52
        $region51: #{tpu_custom_call.1} parent=39 // pred_region
          %283 = dma.done [#allocation6], 256
        $region52: #{tpu_custom_call.1} parent=39 // pred_fallthru
          _
        // Predicated region
        $region53: #{tpu_custom_call.1} parent=39 // pred_check
          %p284 = pneg %p108
        $region54: #{tpu_custom_call.1} parent=39 // pred_check_branch
          %286 = sbr.rel (%p284) target = $region56
        $region55: #{tpu_custom_call.1} parent=39 // pred_region
          %288 = dma.done [#allocation9], 1024
        $region56: #{tpu_custom_call.1} parent=39 // pred_fallthru
          _
        // Predicated region
        $region57: #{tpu_custom_call.1} parent=39 // pred_check
          %p289 = pneg %p129
        $region58: #{tpu_custom_call.1} parent=39 // pred_check_branch
          %291 = sbr.rel (%p289) target = $region60
        $region59: #{tpu_custom_call.1} parent=39 // pred_region
          %293 = dma.done [#allocation9], 1024
        $region60: #{tpu_custom_call.1} parent=39 // pred_fallthru
          _
        %s294 = sand.u32 %s32, 1
        %s295 = scalar_lea.sflag [#allocation3], %s294
        %s296 = sand.u32 %s32, 1
        %s297 = smul.addr %s296, 16
        %s298 = scalar_lea.vmem [#allocation2], %s297
        %p299 = pneg %p45
        %p300 = pneg %p42
        %p301 = pneg %p66
        %p302 = pneg %p63
        %p303 = pneg %p87
        %p304 = pneg %p84
        %p305 = pneg %p108
        %p306 = pneg %p105
        %p307 = pneg %p129
        %p308 = pneg %p126
        %p309 = pneg %p155
        %p310 = pneg %p152
        %s311 = sand.u32 %s142, 1
        %s312 = scalar_lea.sflag [#allocation4], %s311
        %s313 = sand.u32 %s142, 1
        %s314 = smul.addr %s313, 16
        %s315 = scalar_lea.vmem [#allocation11], %s314
        %s316 = smul.u32 2, %s24
        %s317 = ssub.s32 3, %s316
        %p318 = scmp.lt.s32.totalorder %s317, 2
        %s319 = scalar_select %p318, %s317, 2
        %s320 = smul.u32 8, %s319
        %s321 = smul.u32 2, %s24
        %s322 = ssub.s32 3, %s321
        %p323 = scmp.lt.s32.totalorder %s322, 2
        %s324 = scalar_select %p323, %s322, 2
        %s325 = smul.u32 8, %s324
        %v327 = vld [vmem:[%s268] sm:$0xff]
        %v328 = vld [vmem:[%s268 + $0x8] sm:$0xff]
        %v329 = vpack.c.bf16 %v328, %v327
        %v330 = vld [vmem:[#allocation7] sm:$0xf]
        %v331 = vld [vmem:[#allocation7 + $0x4] sm:$0xf]
        %v332 = vld [vmem:[#allocation7 + $0x8] sm:$0xf]
        %v333 = vld [vmem:[#allocation7 + $0xc] sm:$0xf]
        %v334 = vld [vmem:[#allocation5] sm:$0x1]
        %v335 = vperm.slane %v334, 0
        %v340 = vunpack.c.l.b16 %v330
        %v341 = vunpack.c.l.b16 %v331
        %v342 = vunpack.c.l.b16 %v332
        %v343 = vunpack.c.l.b16 %v333
        %v344 = vpack.c.b16 %v341, %v340
        %v345 = vpack.c.b16 %v343, %v342
        %vm348 = vcmask 261120
        %v350 = vsel %vm348, %v329, 0
        %352 = vmatpush.bf16.msra.mxu0 0
        %353 = vmatpush.bf16.msra.mxu0 0
        %354 = vmatpush.bf16.msra.mxu0 0
        %355 = vmatpush.bf16.msra.mxu0 0
        %356 = vmatpush.bf16.msra.mxu0 0
        %357 = vmatpush.bf16.msra.mxu0 0
        %358 = vmatpush.bf16.msra.mxu0 %v345
        %359 = vmatpush.bf16.msra.mxu0 %v344
        %360 = vmatmul.bf16.gmra.mxu0 %v350
        %v361 = vpop.f32.mrf.mxu0
        %v362 = vadd.f32 %v335, %v361
        %v363 = vpop.f32.mrf.mxu0
        %v364 = vadd.f32 %v335, %v363
        %365 = vdwg.mxu0
        %v366 = vmax.f32 %v362, 0.0
        %v367 = vmax.f32 %v364, 0.0
        %v368 = vpack.c.bf16 %v367, %v366
        %v369 = vld [vmem:[#allocation8] sm:$0xf]
        %v370 = vld [vmem:[#allocation8 + $0x4] sm:$0xf]
        %v371 = vld [vmem:[#allocation8 + $0x8] sm:$0xf]
        %v372 = vld [vmem:[#allocation8 + $0xc] sm:$0xf]
        %v373 = vld [vmem:[#allocation8 + $0x10] sm:$0xf]
        %v374 = vld [vmem:[#allocation8 + $0x14] sm:$0xf]
        %v375 = vld [vmem:[#allocation8 + $0x18] sm:$0xf]
        %v376 = vld [vmem:[#allocation8 + $0x1c] sm:$0xf]
        %v377 = vld [vmem:[#allocation8 + $0x20] sm:$0xf]
        %v378 = vld [vmem:[#allocation8 + $0x24] sm:$0xf]
        %v379 = vld [vmem:[#allocation8 + $0x28] sm:$0xf]
        %v380 = vld [vmem:[#allocation8 + $0x2c] sm:$0xf]
        %v381 = vld [vmem:[#allocation8 + $0x30] sm:$0xf]
        %v382 = vld [vmem:[#allocation8 + $0x34] sm:$0xf]
        %v383 = vld [vmem:[#allocation8 + $0x38] sm:$0xf]
        %v384 = vld [vmem:[#allocation8 + $0x3c] sm:$0xf]
        %v385 = vld [vmem:[#allocation5 + $0x1] sm:$0x1]
        %v386 = vperm.slane %v385, 0
        %v403 = vunpack.c.l.b16 %v369
        %v404 = vunpack.c.l.b16 %v370
        %v405 = vunpack.c.l.b16 %v371
        %v406 = vunpack.c.l.b16 %v372
        %v407 = vunpack.c.l.b16 %v373
        %v408 = vunpack.c.l.b16 %v374
        %v409 = vunpack.c.l.b16 %v375
        %v410 = vunpack.c.l.b16 %v376
        %v411 = vunpack.c.l.b16 %v377
        %v412 = vunpack.c.l.b16 %v378
        %v413 = vunpack.c.l.b16 %v379
        %v414 = vunpack.c.l.b16 %v380
        %v415 = vunpack.c.l.b16 %v381
        %v416 = vunpack.c.l.b16 %v382
        %v417 = vunpack.c.l.b16 %v383
        %v418 = vunpack.c.l.b16 %v384
        %v419 = vpack.c.b16 %v404, %v403
        %v420 = vpack.c.b16 %v406, %v405
        %v421 = vpack.c.b16 %v408, %v407
        %v422 = vpack.c.b16 %v410, %v409
        %v423 = vpack.c.b16 %v412, %v411
        %v424 = vpack.c.b16 %v414, %v413
        %v425 = vpack.c.b16 %v416, %v415
        %v426 = vpack.c.b16 %v418, %v417
        %435 = vmatpush.bf16.msra.mxu0 %v426
        %436 = vmatpush.bf16.msra.mxu0 %v425
        %437 = vmatpush.bf16.msra.mxu0 %v424
        %438 = vmatpush.bf16.msra.mxu0 %v423
        %439 = vmatpush.bf16.msra.mxu0 %v422
        %440 = vmatpush.bf16.msra.mxu0 %v421
        %441 = vmatpush.bf16.msra.mxu0 %v420
        %442 = vmatpush.bf16.msra.mxu0 %v419
        %443 = vmatmul.bf16.gmra.mxu0 %v368
        %v444 = vpop.f32.mrf.mxu0
        %v445 = vadd.f32 %v386, %v444
        %v446 = vpop.f32.mrf.mxu0
        %v447 = vadd.f32 %v386, %v446
        %448 = vdwg.mxu0
        %v449 = vmax.f32 %v445, 0.0
        %v450 = vmax.f32 %v447, 0.0
        %v451 = vpack.c.bf16 %v450, %v449
        %v452 = vld [vmem:[#allocation10] sm:$0xf]
        %v453 = vld [vmem:[#allocation10 + $0x4] sm:$0xf]
        %v454 = vld [vmem:[#allocation10 + $0x8] sm:$0xf]
        %v455 = vld [vmem:[#allocation10 + $0xc] sm:$0xf]
        %v456 = vld [vmem:[#allocation10 + $0x10] sm:$0xf]
        %v457 = vld [vmem:[#allocation10 + $0x14] sm:$0xf]
        %v458 = vld [vmem:[#allocation10 + $0x18] sm:$0xf]
        %v459 = vld [vmem:[#allocation10 + $0x1c] sm:$0xf]
        %v460 = vld [vmem:[#allocation10 + $0x20] sm:$0xf]
        %v461 = vld [vmem:[#allocation10 + $0x24] sm:$0xf]
        %v462 = vld [vmem:[#allocation10 + $0x28] sm:$0xf]
        %v463 = vld [vmem:[#allocation10 + $0x2c] sm:$0xf]
        %v464 = vld [vmem:[#allocation10 + $0x30] sm:$0xf]
        %v465 = vld [vmem:[#allocation10 + $0x34] sm:$0xf]
        %v466 = vld [vmem:[#allocation10 + $0x38] sm:$0xf]
        %v467 = vld [vmem:[#allocation10 + $0x3c] sm:$0xf]
        %v468 = vld [vmem:[#allocation5 + $0x2] sm:$0x1]
        %v469 = vperm.slane %v468, 0
        %v486 = vunpack.c.l.b16 %v452
        %v487 = vunpack.c.l.b16 %v453
        %v488 = vunpack.c.l.b16 %v454
        %v489 = vunpack.c.l.b16 %v455
        %v490 = vunpack.c.l.b16 %v456
        %v491 = vunpack.c.l.b16 %v457
        %v492 = vunpack.c.l.b16 %v458
        %v493 = vunpack.c.l.b16 %v459
        %v494 = vunpack.c.l.b16 %v460
        %v495 = vunpack.c.l.b16 %v461
        %v496 = vunpack.c.l.b16 %v462
        %v497 = vunpack.c.l.b16 %v463
        %v498 = vunpack.c.l.b16 %v464
        %v499 = vunpack.c.l.b16 %v465
        %v500 = vunpack.c.l.b16 %v466
        %v501 = vunpack.c.l.b16 %v467
        %v502 = vpack.c.b16 %v487, %v486
        %v503 = vpack.c.b16 %v489, %v488
        %v504 = vpack.c.b16 %v491, %v490
        %v505 = vpack.c.b16 %v493, %v492
        %v506 = vpack.c.b16 %v495, %v494
        %v507 = vpack.c.b16 %v497, %v496
        %v508 = vpack.c.b16 %v499, %v498
        %v509 = vpack.c.b16 %v501, %v500
        %518 = vmatpush.bf16.msra.mxu0 %v509
        %519 = vmatpush.bf16.msra.mxu0 %v508
        %520 = vmatpush.bf16.msra.mxu0 %v507
        %521 = vmatpush.bf16.msra.mxu0 %v506
        %522 = vmatpush.bf16.msra.mxu0 %v505
        %523 = vmatpush.bf16.msra.mxu0 %v504
        %524 = vmatpush.bf16.msra.mxu0 %v503
        %525 = vmatpush.bf16.msra.mxu0 %v502
        %526 = vmatmul.bf16.gmra.mxu0 %v451
        %v527 = vpop.f32.mrf.mxu0
        %v528 = vadd.f32 %v469, %v527
        %v529 = vpop.f32.mrf.mxu0
        %v530 = vadd.f32 %v469, %v529
        %531 = vdwg.mxu0
        %v532 = vlaneseq
        %v533 = vand.u32 %v532, 127
        %vm534 = vcmp.lt.s32.totalorder %v533, 10
        %v535 = vsel %vm534, %v528, -1e+30
        %v536 = vsel %vm534, %v530, -1e+30
        %537 = vmax.xlane.f32.xlu0 %v535
        %v538 = vpop.xlane.xlu0 %537
        %539 = vmax.xlane.f32.xlu0 %v536
        %v540 = vpop.xlane.xlu0 %539
        %v541 = vsub.f32 %v535, %v538
        %v542 = vsub.f32 %v536, %v540
        %v543 = vmul.f32 %v541, 1.442695
        %v544 = vpow.pop %v543
        %v545 = vmul.f32 %v542, 1.442695
        %v546 = vpow.pop %v545
        %547 = vadd.xlane.f32.xlu0 %v544
        %v548 = vpop.xlane.xlu0 %547
        %549 = vadd.xlane.f32.xlu0 %v546
        %v550 = vpop.xlane.xlu0 %549
        %v551 = vlog2.pop %v548
        %v552 = vmul.f32 %v551, 0.6931472
        %v553 = vlog2.pop %v550
        %v554 = vmul.f32 %v553, 0.6931472
        %v555 = vsub.f32 %v541, %v552
        %v556 = vsub.f32 %v542, %v554
        %557 = vst [vmem:[%s315] sm:$0xff] %v555
        %558 = vst [vmem:[%s315 + $0x8] sm:$0xff] %v556
        %s559 = sand.u32 %s142, 1
        %s560 = scalar_lea.sflag [#allocation4], %s559
        %s561 = sand.u32 %s142, 1
        %s562 = smul.addr %s561, 16
        %s563 = scalar_lea.vmem [#allocation11], %s562
        // Predicated region
        $region61: #{tpu_custom_call.1} parent=39 // pred_check
          %p564 = pneg %p152
        $region62: #{tpu_custom_call.1} parent=39 // pred_check_branch
          %566 = sbr.rel (%p564) target = $region64
        $region63: #{tpu_custom_call.1} parent=39 // pred_region
          %s567 = smul.u32 2, %s24
          %s568 = ssub.s32 3, %s567
          %p569 = scmp.lt.s32.totalorder %s568, 2
          %s570 = scalar_select %p569, %s568, 2
          %s571 = smul.u32 8, %s570
          %s572 = ssub.s32 16, %s571
          %s573 = sshll.u32 %s572, 4
          %574 = vsyncadd %s560, %s573
          %p575 = scmp.ne.s32.totalorder 0, %s571
          %s576 = smul.addr %s567, 8
          %s577 = scalar_lea.hbm %s5, %s576
          %s578 = smul.u32 8, %s570
          %s579 = sshll.u32 %s563, 4
          %s580 = int_to_ptr.vmem [resolvable:$true] %s579
          %s581 = sshll.u32 %s577, 4
          %s582 = int_to_ptr.hbm [resolvable:$true] %s581
          %s583 = sshll.u32 %s578, 4
          %587 = dma.vmem_to_hbm [thread:$0]  (%p575), %s580, %s583, %s582, %s560, 128, 128, 8
        $region64: #{tpu_custom_call.1} parent=39 // pred_fallthru
          _
      $region40: #{tpu_custom_call.1} parent=5 // pred_fallthru
        _
      %p588 = scmp.le.s32.totalorder 2, %s19
      // Predicated region
      $region65: #{tpu_custom_call.1} parent=5 // pred_check
        %p589 = pneg %p588
      $region66: #{tpu_custom_call.1} parent=5 // pred_check_branch
        %591 = sbr.rel (%p589) target = $region68
      $region67: #{tpu_custom_call.1} parent=5 // pred_region
        %s592 = ssub.s32 %s19, 2
        // Predicated region
        $region69: #{tpu_custom_call.1} parent=67 // pred_check
          %p593 = pneg %p158
        $region70: #{tpu_custom_call.1} parent=67 // pred_check_branch
          %595 = sbr.rel (%p593) target = $region72
        $region71: #{tpu_custom_call.1} parent=67 // pred_region
          %s596 = sand.u32 %s143, 1
          %s597 = scalar_lea.sflag [#allocation4], %s596
          %s598 = sand.u32 %s143, 1
          %s599 = smul.addr %s598, 16
          %s600 = scalar_lea.vmem [#allocation11], %s599
          %602 = dma.done %s597, 256
        $region72: #{tpu_custom_call.1} parent=67 // pred_fallthru
          _
      $region68: #{tpu_custom_call.1} parent=5 // pred_fallthru
        _
    $region6: #{tpu_custom_call.1} parent=1 // loop_footer
      %s23 = sadd.s32 1, %s19
    $region7: #{tpu_custom_call.1} parent=1 // loop_footer_branch
      %18 = sbr.rel target = $region3
    $region8: #{tpu_custom_call.1} parent=1 // loop_exit
      _
    %603 = vsyncpa [#allocation3], 1
    %s604 = scalar_lea.sflag [#allocation3], 1
    %605 = vsyncpa %s604, 1
    %606 = vsyncpa [#allocation6], 1
    %607 = vsyncpa [#allocation9], 1
    %608 = vsyncpa [#allocation4], 1
    %s609 = scalar_lea.sflag [#allocation4], 1
    %610 = vsyncpa %s609, 1

</llo_original>
